<compile_context>
chip_gen: v7x
topology: tpu7x:2x2x1
jax: 0.10.0
libtpu: 0.0.40
codegen_flags: <defaults>
</compile_context>

<pallas_src>
import jax
import jax.numpy as jnp
from jax.experimental import pallas as pl
from jax.experimental.pallas import tpu as pltpu

IGNORE_LABEL = 255
LOSS_WEIGHT = 1.0

_LANE = 128
# 128K-256K pixels/step amortizes the ~0.35us fixed grid-step overhead; with the
# dense (rows, 128) layout, 256K pixels @ C=4 f32 is ~10 MiB of pipeline VMEM,
# which fits every generation (incl. v5e's 16 MiB scoped default).
_MAX_BLOCK_PIXELS = 256 * 1024


def _vmem_capacity_bytes():
    # v5e/v6e: 128 MiB, v7x: 64 MiB.  Fall back to the smallest (v7x) so the
    # block sizing stays safe if the query is unavailable.
    try:
        return int(pltpu.get_tpu_info().vmem_capacity_bytes)
    except Exception:
        return 64 * 1024 * 1024


def cross_entropy_std(score_nchw, target_nhw, *, block_pixels=None,
                      ignore_label=IGNORE_LABEL, loss_weight=LOSS_WEIGHT):
    """loss_weight * mean(CE(score, target)[CE != 0]); ignore_label gives CE == 0.

    Matches the PyTorch module's default path (sample='std', class_weight=None).
    Logits may be f32 or bf16 (accumulation is f32 in-kernel); targets may be
    any integer dtype (streamed narrow, widened in-kernel).
    """
    n, c, h, w = score_nchw.shape
    hw = h * w

    # ---- target: keep it narrow on the wire (uint8/int16/int32 pass through) ----
    tgt = target_nhw
    if (not jnp.issubdtype(tgt.dtype, jnp.integer)) or tgt.dtype.itemsize > 4:
        tgt = tgt.astype(jnp.int32)

    # ---- pixels as a dense 2-D (rows, 128) slab: full vreg occupancy for any C ----
    hw128 = -(-hw // _LANE) * _LANE
    logits = score_nchw.reshape(n, c, hw)
    if hw128 != hw:
        # Rare (H*W not a multiple of 128): one-time logits pad; the padded
        # pixels are masked via the ignore_label-padded target below.
        logits = jnp.pad(logits, ((0, 0), (0, 0), (0, hw128 - hw)))
    r = hw128 // _LANE
    logits = logits.reshape(n, c, r, _LANE)

    logit_isz = jnp.dtype(logits.dtype).itemsize
    tgt_isz = jnp.dtype(tgt.dtype).itemsize

    # ---- block sizing from a padded-VMEM budget (per generation) ----
    if block_pixels is None:
        block_pixels = _MAX_BLOCK_PIXELS
    max_block_r = max(1, block_pixels // _LANE)

    vmem_cap = _vmem_capacity_bytes()
    budget = min(int(vmem_cap * 0.6), 48 * 1024 * 1024)   # pipeline footprint budget
    # Double-buffered pipeline bytes per pixel-row (128 pixels):
    #   logits: 2 * C * 128 * isz   (dense (rows,128) tiles -> no sublane padding)
    #   target: 2 * 128 * isz
    bytes_per_row = _LANE * 2 * (c * logit_isz + tgt_isz)
    block_r = min(max_block_r, max(32, budget // bytes_per_row))
    if block_r >= r:
        block_r = r                      # whole pixel axis in one block (full-dim exemption)
    else:
        block_r -= block_r % 32          # multiple of 32: safe tiling for f32/bf16/int8 targets
    grid_r = pl.cdiv(r, block_r)

    # Pad the (cheap) target to full grid coverage with ignore_label so no
    # per-step tail mask is needed; logits are NOT padded past hw128 — their
    # out-of-range reads in the last block are zeroed by the ignore mask.
    r_pad = grid_r * block_r
    tgt = tgt.reshape(n, hw)
    if r_pad * _LANE != hw:
        tgt = jnp.pad(tgt, ((0, 0), (0, r_pad * _LANE - hw)),
                      constant_values=ignore_label)
    tgt = tgt.reshape(n, r_pad, _LANE)

    footprint = (2 * c * block_r * _LANE * logit_isz      # logits double buffer
                 + 2 * block_r * _LANE * tgt_isz          # target double buffer
                 + 2 * 8 * _LANE * 4)                     # (1,128) f32 scratch, sublane-padded
    vmem_limit = int(min(vmem_cap, max(32 * 1024 * 1024, footprint + (8 << 20))))

    def kernel(logits_ref, target_ref, sum_ref, cnt_ref, acc_sum, acc_cnt):
        j = pl.program_id(1)

        @pl.when(j == 0)
        def _():
            acc_sum[...] = jnp.zeros_like(acc_sum)
            acc_cnt[...] = jnp.zeros_like(acc_cnt)

        t = target_ref[0].astype(jnp.int32)               # (block_r, 128)

        # Channel-unrolled, numerically stable log-sum-exp + target-logit gather.
        # Each slab is a dense (block_r, 128) tile: no sublane-padding waste, no
        # cross-sublane reduction over C, no (C, hw) iota/compare.
        def chan(i):
            return logits_ref[0, i].astype(jnp.float32)

        x0 = chan(0)
        m = x0
        for ch in range(1, c):
            m = jnp.maximum(m, chan(ch))
        s = jnp.exp(x0 - m)
        tgt_logit = jnp.where(t == 0, x0, 0.0)
        for ch in range(1, c):
            x = chan(ch)
            s = s + jnp.exp(x - m)
            tgt_logit = jnp.where(t == ch, x, tgt_logit)

        loss = (jnp.log(s) + m) - tgt_logit
        # ignore_label pixels (and wrapper padding / OOB tail garbage) -> exactly
        # 0, which also keeps them out of the `!= 0` count (PyTorch semantics).
        loss = jnp.where(t != ignore_label, loss, 0.0)

        # Lane-parallel accumulation; scalar collapse happens once per batch row.
        acc_sum[...] += jnp.sum(loss, axis=0, keepdims=True)
        acc_cnt[...] += jnp.sum((loss != 0.0).astype(jnp.float32),
                                axis=0, keepdims=True)

        @pl.when(j == pl.num_programs(1) - 1)
        def _():
            sum_ref[...] = jnp.sum(acc_sum[...]).reshape(1, 1, 1)
            cnt_ref[...] = jnp.sum(acc_cnt[...]).reshape(1, 1, 1)

    part_sum, part_cnt = pl.pallas_call(
        kernel,
        out_shape=(
            jax.ShapeDtypeStruct((n, 1, 1), jnp.float32),
            jax.ShapeDtypeStruct((n, 1, 1), jnp.float32),
        ),
        grid_spec=pltpu.PrefetchScalarGridSpec(
            num_scalar_prefetch=0,
            grid=(n, grid_r),
            in_specs=[
                pl.BlockSpec((1, c, block_r, _LANE), lambda b, j: (b, 0, j, 0)),
                pl.BlockSpec((1, block_r, _LANE), lambda b, j: (b, j, 0)),
            ],
            out_specs=[
                pl.BlockSpec((1, 1, 1), lambda b, j: (b, 0, 0)),
                pl.BlockSpec((1, 1, 1), lambda b, j: (b, 0, 0)),
            ],
            scratch_shapes=[
                pltpu.VMEM((1, _LANE), jnp.float32),
                pltpu.VMEM((1, _LANE), jnp.float32),
            ],
        ),
        compiler_params=pltpu.CompilerParams(
            # Batch axis shards across TensorCores where available (v7x);
            # harmless on single-TC chips.
            dimension_semantics=("parallel", "arbitrary"),
            vmem_limit_bytes=vmem_limit,
        ),
    )(logits, tgt)

    total_sum = jnp.sum(part_sum)
    total_cnt = jnp.sum(part_cnt)
    # All-ignored input gives 0/0 = NaN, same as PyTorch's mean of an empty tensor.
    return loss_weight * (total_sum / total_cnt)


def _reference(score_nchw, target_nhw):
    # pure-JAX reference
    n, c, h, w = score_nchw.shape
    logits = jnp.transpose(score_nchw, (0, 2, 3, 1)).reshape(-1, c).astype(jnp.float32)
    t = target_nhw.reshape(-1).astype(jnp.int32)
    lse = jax.nn.logsumexp(logits, axis=-1)
    tgt = jnp.take_along_axis(logits, jnp.clip(t, 0, c - 1)[:, None], axis=-1)[:, 0]
    loss = jnp.where(t != IGNORE_LABEL, lse - tgt, 0.0)
    nz = loss != 0.0
    return LOSS_WEIGHT * jnp.sum(loss) / jnp.sum(nz.astype(jnp.float32))


if __name__ == "__main__":
    key = jax.random.PRNGKey(0)
    k1, k2, k3 = jax.random.split(key, 3)

    # Case 1: H*W a multiple of 128 (common segmentation case).
    N, C, H, W = 2, 4, 16, 16
    score = jax.random.normal(k1, (N, C, H, W), dtype=jnp.float32)
    target = jax.random.randint(k2, (N, H, W), 0, C, dtype=jnp.int32)
    ign_mask = jax.random.uniform(k3, (N, H, W)) < 0.1
    target = jnp.where(ign_mask, IGNORE_LABEL, target)

    out = jax.block_until_ready(cross_entropy_std(score, target))
    ref = _reference(score, target)
    assert jnp.allclose(out, ref, rtol=1e-5, atol=1e-5), (out, ref)

    # Case 2: ragged H*W (exercises wrapper-side padding / ignore masking).
    k4, k5, k6 = jax.random.split(jax.random.PRNGKey(1), 3)
    N2, C2, H2, W2 = 2, 4, 20, 20
    score2 = jax.random.normal(k4, (N2, C2, H2, W2), dtype=jnp.float32)
    target2 = jax.random.randint(k5, (N2, H2, W2), 0, C2, dtype=jnp.int32)
    target2 = jnp.where(jax.random.uniform(k6, (N2, H2, W2)) < 0.1,
                        IGNORE_LABEL, target2)
    out2 = jax.block_until_ready(cross_entropy_std(score2, target2))
    ref2 = _reference(score2, target2)
    assert jnp.allclose(out2, ref2, rtol=1e-5, atol=1e-5), (out2, ref2)

    print("KERNEL_OK")
</pallas_src>

<mosaic_0001>
module attributes {stable_mosaic.version = 11 : i64} {
  func.func @kernel(%arg0: i32, %arg1: i32, %arg2: memref<1x4x2x128xf32, #tpu.memory_space<vmem>>, %arg3: memref<1x2x128xi32, #tpu.memory_space<vmem>>, %arg4: memref<1x1x1xf32, #tpu.memory_space<vmem>>, %arg5: memref<1x1x1xf32, #tpu.memory_space<vmem>>, %arg6: memref<1x128xf32, #tpu.memory_space<vmem>>, %arg7: memref<1x128xf32, #tpu.memory_space<vmem>>) attributes {dimension_semantics = [#tpu.dimension_semantics<parallel>, #tpu.dimension_semantics<arbitrary>], iteration_bounds = array<i64: 2, 1>, scalar_prefetch = 0 : i64, scratch_operands = 2 : i64, tpu.core_type = #tpu.core_type<tc>, window_params = [{transform_indices = @transform_0, window_bounds = array<i64: 1, 4, 2, 128>}, {transform_indices = @transform_1, window_bounds = array<i64: 1, 2, 128>}, {transform_indices = @transform_2, window_bounds = array<i64: 1, 1, 1>}, {transform_indices = @transform_3, window_bounds = array<i64: 1, 1, 1>}]} {
    %c0_i32 = arith.constant 0 : i32
    %0 = arith.cmpi eq, %arg1, %c0_i32 : i32
    %1 = arith.extui %0 : i1 to i32
    %c0_i32_0 = arith.constant 0 : i32
    %2 = arith.cmpi ne, %1, %c0_i32_0 : i32
    scf.if %2 {
      %cst_43 = arith.constant 0.000000e+00 : f32
      %70 = vector.broadcast %cst_43 : f32 to vector<1x128xf32>
      %c0_44 = arith.constant 0 : index
      %c0_45 = arith.constant 0 : index
      %71 = vector.load %arg6[%c0_44, %c0_45] : memref<1x128xf32, #tpu.memory_space<vmem>>, vector<1x128xf32>
      tpu.vector_store %arg6[%c0_44, %c0_45], %70 {strides = array<i32>} : memref<1x128xf32, #tpu.memory_space<vmem>>, vector<1x128xf32>,
      %cst_46 = arith.constant 0.000000e+00 : f32
      %72 = vector.broadcast %cst_46 : f32 to vector<1x128xf32>
      %c0_47 = arith.constant 0 : index
      %c0_48 = arith.constant 0 : index
      %73 = vector.load %arg7[%c0_47, %c0_48] : memref<1x128xf32, #tpu.memory_space<vmem>>, vector<1x128xf32>
      tpu.vector_store %arg7[%c0_47, %c0_48], %72 {strides = array<i32>} : memref<1x128xf32, #tpu.memory_space<vmem>>, vector<1x128xf32>,
    } else {
    }
    %c0 = arith.constant 0 : index
    %c0_1 = arith.constant 0 : index
    %c0_2 = arith.constant 0 : index
    %3 = vector.load %arg3[%c0, %c0_1, %c0_2] : memref<1x2x128xi32, #tpu.memory_space<vmem>>, vector<1x2x128xi32>
    %4 = vector.shape_cast %3 : vector<1x2x128xi32> to vector<2x128xi32>
    %c0_3 = arith.constant 0 : index
    %c0_4 = arith.constant 0 : index
    %c0_5 = arith.constant 0 : index
    %c0_6 = arith.constant 0 : index
    %5 = vector.load %arg2[%c0_3, %c0_4, %c0_5, %c0_6] : memref<1x4x2x128xf32, #tpu.memory_space<vmem>>, vector<1x1x2x128xf32>
    %6 = vector.shape_cast %5 : vector<1x1x2x128xf32> to vector<2x128xf32>
    %c0_7 = arith.constant 0 : index
    %c1 = arith.constant 1 : index
    %c0_8 = arith.constant 0 : index
    %c0_9 = arith.constant 0 : index
    %7 = vector.load %arg2[%c0_7, %c1, %c0_8, %c0_9] : memref<1x4x2x128xf32, #tpu.memory_space<vmem>>, vector<1x1x2x128xf32>
    %8 = vector.shape_cast %7 : vector<1x1x2x128xf32> to vector<2x128xf32>
    %9 = arith.maximumf %6, %8 : vector<2x128xf32>
    %c0_10 = arith.constant 0 : index
    %c2 = arith.constant 2 : index
    %c0_11 = arith.constant 0 : index
    %c0_12 = arith.constant 0 : index
    %10 = vector.load %arg2[%c0_10, %c2, %c0_11, %c0_12] : memref<1x4x2x128xf32, #tpu.memory_space<vmem>>, vector<1x1x2x128xf32>
    %11 = vector.shape_cast %10 : vector<1x1x2x128xf32> to vector<2x128xf32>
    %12 = arith.maximumf %9, %11 : vector<2x128xf32>
    %c0_13 = arith.constant 0 : index
    %c3 = arith.constant 3 : index
    %c0_14 = arith.constant 0 : index
    %c0_15 = arith.constant 0 : index
    %13 = vector.load %arg2[%c0_13, %c3, %c0_14, %c0_15] : memref<1x4x2x128xf32, #tpu.memory_space<vmem>>, vector<1x1x2x128xf32>
    %14 = vector.shape_cast %13 : vector<1x1x2x128xf32> to vector<2x128xf32>
    %15 = arith.maximumf %12, %14 : vector<2x128xf32>
    %16 = arith.subf %6, %15 : vector<2x128xf32>
    %17 = math.exp %16 : vector<2x128xf32>
    %c0_i32_16 = arith.constant 0 : i32
    %18 = vector.broadcast %c0_i32_16 : i32 to vector<2x128xi32>
    %19 = arith.cmpi eq, %4, %18 : vector<2x128xi32>
    %cst = arith.constant 0.000000e+00 : f32
    %20 = vector.broadcast %cst : f32 to vector<2x128xf32>
    %21 = arith.select %19, %6, %20 : vector<2x128xi1>, vector<2x128xf32>
    %c0_17 = arith.constant 0 : index
    %c1_18 = arith.constant 1 : index
    %c0_19 = arith.constant 0 : index
    %c0_20 = arith.constant 0 : index
    %22 = vector.load %arg2[%c0_17, %c1_18, %c0_19, %c0_20] : memref<1x4x2x128xf32, #tpu.memory_space<vmem>>, vector<1x1x2x128xf32>
    %23 = vector.shape_cast %22 : vector<1x1x2x128xf32> to vector<2x128xf32>
    %24 = arith.subf %23, %15 : vector<2x128xf32>
    %25 = math.exp %24 : vector<2x128xf32>
    %26 = arith.addf %17, %25 : vector<2x128xf32>
    %c1_i32 = arith.constant 1 : i32
    %27 = vector.broadcast %c1_i32 : i32 to vector<2x128xi32>
    %28 = arith.cmpi eq, %4, %27 : vector<2x128xi32>
    %29 = arith.select %28, %23, %21 : vector<2x128xi1>, vector<2x128xf32>
    %c0_21 = arith.constant 0 : index
    %c2_22 = arith.constant 2 : index
    %c0_23 = arith.constant 0 : index
    %c0_24 = arith.constant 0 : index
    %30 = vector.load %arg2[%c0_21, %c2_22, %c0_23, %c0_24] : memref<1x4x2x128xf32, #tpu.memory_space<vmem>>, vector<1x1x2x128xf32>
    %31 = vector.shape_cast %30 : vector<1x1x2x128xf32> to vector<2x128xf32>
    %32 = arith.subf %31, %15 : vector<2x128xf32>
    %33 = math.exp %32 : vector<2x128xf32>
    %34 = arith.addf %26, %33 : vector<2x128xf32>
    %c2_i32 = arith.constant 2 : i32
    %35 = vector.broadcast %c2_i32 : i32 to vector<2x128xi32>
    %36 = arith.cmpi eq, %4, %35 : vector<2x128xi32>
    %37 = arith.select %36, %31, %29 : vector<2x128xi1>, vector<2x128xf32>
    %c0_25 = arith.constant 0 : index
    %c3_26 = arith.constant 3 : index
    %c0_27 = arith.constant 0 : index
    %c0_28 = arith.constant 0 : index
    %38 = vector.load %arg2[%c0_25, %c3_26, %c0_27, %c0_28] : memref<1x4x2x128xf32, #tpu.memory_space<vmem>>, vector<1x1x2x128xf32>
    %39 = vector.shape_cast %38 : vector<1x1x2x128xf32> to vector<2x128xf32>
    %40 = arith.subf %39, %15 : vector<2x128xf32>
    %41 = math.exp %40 : vector<2x128xf32>
    %42 = arith.addf %34, %41 : vector<2x128xf32>
    %c3_i32 = arith.constant 3 : i32
    %43 = vector.broadcast %c3_i32 : i32 to vector<2x128xi32>
    %44 = arith.cmpi eq, %4, %43 : vector<2x128xi32>
    %45 = arith.select %44, %39, %37 : vector<2x128xi1>, vector<2x128xf32>
    %46 = math.log %42 : vector<2x128xf32>
    %47 = arith.addf %46, %15 : vector<2x128xf32>
    %48 = arith.subf %47, %45 : vector<2x128xf32>
    %c255_i32 = arith.constant 255 : i32
    %49 = vector.broadcast %c255_i32 : i32 to vector<2x128xi32>
    %50 = arith.cmpi ne, %4, %49 : vector<2x128xi32>
    %cst_29 = arith.constant 0.000000e+00 : f32
    %51 = vector.broadcast %cst_29 : f32 to vector<2x128xf32>
    %52 = arith.select %50, %48, %51 : vector<2x128xi1>, vector<2x128xf32>
    %c0_30 = arith.constant 0 : index
    %c0_31 = arith.constant 0 : index
    %53 = vector.load %arg6[%c0_30, %c0_31] : memref<1x128xf32, #tpu.memory_space<vmem>>, vector<1x128xf32>
    %cst_32 = arith.constant dense<0.000000e+00> : vector<128xf32>
    %54 = vector.multi_reduction <add>, %52, %cst_32 [0] : vector<2x128xf32> to vector<128xf32>
    %55 = vector.shape_cast %54 : vector<128xf32> to vector<1x128xf32>
    %56 = arith.addf %53, %55 : vector<1x128xf32>
    %c0_33 = arith.constant 0 : index
    %c0_34 = arith.constant 0 : index
    %57 = vector.load %arg6[%c0_33, %c0_34] : memref<1x128xf32, #tpu.memory_space<vmem>>, vector<1x128xf32>
    tpu.vector_store %arg6[%c0_33, %c0_34], %56 {strides = array<i32>} : memref<1x128xf32, #tpu.memory_space<vmem>>, vector<1x128xf32>,
    %c0_35 = arith.constant 0 : index
    %c0_36 = arith.constant 0 : index
    %58 = vector.load %arg7[%c0_35, %c0_36] : memref<1x128xf32, #tpu.memory_space<vmem>>, vector<1x128xf32>
    %cst_37 = arith.constant 0.000000e+00 : f32
    %59 = vector.broadcast %cst_37 : f32 to vector<2x128xf32>
    %60 = arith.cmpf one, %52, %59 : vector<2x128xf32>
    %61 = arith.extui %60 : vector<2x128xi1> to vector<2x128xi32>
    %62 = arith.sitofp %61 : vector<2x128xi32> to vector<2x128xf32>
    %cst_38 = arith.constant dense<0.000000e+00> : vector<128xf32>
    %63 = vector.multi_reduction <add>, %62, %cst_38 [0] : vector<2x128xf32> to vector<128xf32>
    %64 = vector.shape_cast %63 : vector<128xf32> to vector<1x128xf32>
    %65 = arith.addf %58, %64 : vector<1x128xf32>
    %c0_39 = arith.constant 0 : index
    %c0_40 = arith.constant 0 : index
    %66 = vector.load %arg7[%c0_39, %c0_40] : memref<1x128xf32, #tpu.memory_space<vmem>>, vector<1x128xf32>
    tpu.vector_store %arg7[%c0_39, %c0_40], %65 {strides = array<i32>} : memref<1x128xf32, #tpu.memory_space<vmem>>, vector<1x128xf32>,
    %c0_i32_41 = arith.constant 0 : i32
    %67 = arith.cmpi eq, %arg1, %c0_i32_41 : i32
    %68 = arith.extui %67 : i1 to i32
    %c0_i32_42 = arith.constant 0 : i32
    %69 = arith.cmpi ne, %68, %c0_i32_42 : i32
    scf.if %69 {
      %c0_43 = arith.constant 0 : index
      %c0_44 = arith.constant 0 : index
      %70 = vector.load %arg6[%c0_43, %c0_44] : memref<1x128xf32, #tpu.memory_space<vmem>>, vector<1x128xf32>
      %71 = vector.shape_cast %70 : vector<1x128xf32> to vector<1x1x128xf32>
      %cst_45 = arith.constant dense<0.000000e+00> : vector<1xf32>
      %72 = vector.multi_reduction <add>, %71, %cst_45 [1, 2] : vector<1x1x128xf32> to vector<1xf32>
      %73 = vector.shape_cast %72 : vector<1xf32> to vector<1x1x1xf32>
      %74 = vector.extract %73[0, 0, 0] : f32 from vector<1x1x1xf32>
      %75 = vector.broadcast %74 : f32 to vector<1x1x1xf32>
      %c0_46 = arith.constant 0 : index
      %c0_47 = arith.constant 0 : index
      %c0_48 = arith.constant 0 : index
      %76 = vector.load %arg4[%c0_46, %c0_47, %c0_48] : memref<1x1x1xf32, #tpu.memory_space<vmem>>, vector<1x1x1xf32>
      tpu.vector_store %arg4[%c0_46, %c0_47, %c0_48], %75 {strides = array<i32>} : memref<1x1x1xf32, #tpu.memory_space<vmem>>, vector<1x1x1xf32>,
      %c0_49 = arith.constant 0 : index
      %c0_50 = arith.constant 0 : index
      %77 = vector.load %arg7[%c0_49, %c0_50] : memref<1x128xf32, #tpu.memory_space<vmem>>, vector<1x128xf32>
      %78 = vector.shape_cast %77 : vector<1x128xf32> to vector<1x1x128xf32>
      %cst_51 = arith.constant dense<0.000000e+00> : vector<1xf32>
      %79 = vector.multi_reduction <add>, %78, %cst_51 [1, 2] : vector<1x1x128xf32> to vector<1xf32>
      %80 = vector.shape_cast %79 : vector<1xf32> to vector<1x1x1xf32>
      %81 = vector.extract %80[0, 0, 0] : f32 from vector<1x1x1xf32>
      %82 = vector.broadcast %81 : f32 to vector<1x1x1xf32>
      %c0_52 = arith.constant 0 : index
      %c0_53 = arith.constant 0 : index
      %c0_54 = arith.constant 0 : index
      %83 = vector.load %arg5[%c0_52, %c0_53, %c0_54] : memref<1x1x1xf32, #tpu.memory_space<vmem>>, vector<1x1x1xf32>
      tpu.vector_store %arg5[%c0_52, %c0_53, %c0_54], %82 {strides = array<i32>} : memref<1x1x1xf32, #tpu.memory_space<vmem>>, vector<1x1x1xf32>,
    } else {
    }
    return
  }
  func.func @transform_0(%arg0: i32, %arg1: i32) -> (i32, i32, i32, i32) {
    %c0_i32 = arith.constant 0 : i32
    %c0_i32_0 = arith.constant 0 : i32
    %c0_i32_1 = arith.constant 0 : i32
    return %arg0, %c0_i32, %arg1, %c0_i32_0 : i32, i32, i32, i32
  }
  func.func @transform_1(%arg0: i32, %arg1: i32) -> (i32, i32, i32) {
    %c0_i32 = arith.constant 0 : i32
    %c0_i32_0 = arith.constant 0 : i32
    return %arg0, %arg1, %c0_i32 : i32, i32, i32
  }
  func.func @transform_2(%arg0: i32, %arg1: i32) -> (i32, i32, i32) {
    %c0_i32 = arith.constant 0 : i32
    %c0_i32_0 = arith.constant 0 : i32
    %c0_i32_1 = arith.constant 0 : i32
    return %arg0, %c0_i32, %c0_i32_0 : i32, i32, i32
  }
  func.func @transform_3(%arg0: i32, %arg1: i32) -> (i32, i32, i32) {
    %c0_i32 = arith.constant 0 : i32
    %c0_i32_0 = arith.constant 0 : i32
    %c0_i32_1 = arith.constant 0 : i32
    return %arg0, %c0_i32, %c0_i32_0 : i32, i32, i32
  }
}

</mosaic_0001>

<llo_original>
// kernel: tpu_custom_call.1
$region0: #{tpu_custom_call.1}
  #allocation0 [shape = 'u32[]', space=smem, size = 0x4, offset = 0x4, fixed_abs, tag = 'smem constant byte address 0x4 - core index']
  #allocation1 [shape = 'u32[144,128]{1,0:T(1,128)}', space=vmem, size = 0x12000, scoped, tag = 'internal scratch']
  #allocation2 [shape = 'f32[1,128]{1,0:T(1,128)}', space=vmem, size = 0x200, scoped, tag = 'scratch operand']
  #allocation3 [shape = 'f32[1,128]{1,0:T(1,128)}', space=vmem, size = 0x200, scoped, tag = 'scratch operand']
  %s0 = inlined_call_operand.hbm [shape: f32[2,4,2,128], index: 0, kind: input, shape index: {}]
  %s1 = inlined_call_operand.hbm [shape: s32[2,2,128], index: 1, kind: input, shape index: {}]
  %s2 = inlined_call_operand.vmem [shape: f32[2,1,1], index: 2, kind: output, shape index: {0}]
  %s3 = inlined_call_operand.vmem [shape: f32[2,1,1], index: 3, kind: output, shape index: {1}]
  %4 = xla_tuple %s2, %s3
  %s5 = sld [smem:[#allocation0]]
  $region65: #{tpu_custom_call.1} parent=0
    _
  %s7 = ssub.s32 1, %s5
  %s8 = scalar_select 0, %s7, %s5
  $region1: #{tpu_custom_call.1} parent=0
    #allocation4 [shape = 'u8[8192]{0}', space=vmem, size = 0x2000, scoped, tag = 'input window, operand 0']
    #allocation5 [shape = 's32[2]{0}', space=sflag, size = 0x8, scoped, tag = 'scoped memory for tpu_custom_call.1']
    #allocation6 [shape = 'u8[2048]{0}', space=vmem, size = 0x800, scoped, tag = 'input window, operand 1']
    #allocation7 [shape = 's32[2]{0}', space=sflag, size = 0x8, scoped, tag = 'scoped memory for tpu_custom_call.1']
    %9 = vsyncpa [#allocation5], 0
    %s10 = scalar_lea.sflag [#allocation5], 1
    %11 = vsyncpa %s10, 0
    %12 = vsyncpa [#allocation7], 0
    %s13 = scalar_lea.sflag [#allocation7], 1
    %14 = vsyncpa %s13, 0
    loop: start=0, step=1, limit=4
    $region2: #{tpu_custom_call.1} parent=1 // loop_pre_header
      _
    $region3: #{tpu_custom_call.1} parent=1 // loop_header
      %s16 = sphi 0, %s20
      %p17 = scmp.ge.s32.totalorder %s16, 4
      %s23 = sphi 0, %s35
      %s24 = sphi 0, %s31
      %s25 = sphi 0, %s23
      %s26 = sphi 0, %s24
      %s27 = sphi 0, %s25
      %s28 = sphi 0, %s26
      %s40 = sphi 0, %s42
      %s43 = sphi 0, %s40
      %s44 = sphi 0, %s43
      %s60 = sphi 0, %s44
      %s68 = sphi 0, %s70
      %s71 = sphi 0, %s68
      %s72 = sphi 0, %s71
      %s88 = sphi 0, %s72
      %s94 = sphi 0, %s96
      %s97 = sphi 0, %s94
      %s98 = sphi 0, %s97
      %s114 = sphi 0, %s98
      %s120 = sphi 0, %s122
      %s123 = sphi 0, %s120
      %s124 = sphi 0, %s123
      %s140 = sphi 0, %s124
    $region4: #{tpu_custom_call.1} parent=1 // loop_header_branch
      %19 = sbr.rel (%p17) target = $region8
    $region5: #{tpu_custom_call.1} parent=1 // loop_body
      %s21 = ssub.s32 %s16, 1
      %s22 = ssub.s32 %s16, 2
      %s29 = sadd.s32 1, %s24
      %p30 = scmp.ge.s32.totalorder %s29, 1
      %s31 = scalar_select %p30, 0, %s29
      %s32 = sadd.s32 1, %s23
      %s33 = scalar_select %p30, %s32, %s23
      %p34 = scmp.ge.s32.totalorder %s33, 2
      %s35 = scalar_select %p34, 0, %s33
      %s36 = ssub.s32 %s23, %s35
      %s37 = ssub.s32 %s24, %s31
      %s38 = sor.u32 %s36, %s37
      %p39 = scmp.eq.s32.totalorder %s38, 0
      %s41 = sadd.s32 %s40, 1
      %s42 = scalar_select %p39, %s40, %s41
      %p45 = pneg %p39
      %p46 = scmp.eq.s32.totalorder %s16, 1
      %p47 = por %p45, %p46
      %p48 = scmp.ne.s32.totalorder %s40, %s43
      %p49 = scmp.eq.s32.totalorder %s16, 0
      %p50 = por %p48, %p49
      %p51 = scmp.ne.s32.totalorder %s40, %s43
      %p52 = scmp.eq.s32.totalorder %s21, 1
      %p53 = por %p51, %p52
      %p54 = scmp.ne.s32.totalorder %s43, %s44
      %p55 = scmp.eq.s32.totalorder %s21, 0
      %p56 = por %p54, %p55
      %p57 = scmp.ne.s32.totalorder %s43, %s44
      %p58 = scmp.eq.s32.totalorder %s22, 1
      %p59 = por %p57, %p58
      %p61 = scmp.ne.s32.totalorder %s44, %s60
      %p62 = scmp.eq.s32.totalorder %s22, 0
      %p63 = por %p61, %p62
      %s64 = ssub.s32 %s23, %s35
      %s65 = ssub.s32 %s24, %s31
      %s66 = sor.u32 %s64, %s65
      %p67 = scmp.eq.s32.totalorder %s66, 0
      %s69 = sadd.s32 %s68, 1
      %s70 = scalar_select %p67, %s68, %s69
      %p73 = pneg %p67
      %p74 = scmp.eq.s32.totalorder %s16, 1
      %p75 = por %p73, %p74
      %p76 = scmp.ne.s32.totalorder %s68, %s71
      %p77 = scmp.eq.s32.totalorder %s16, 0
      %p78 = por %p76, %p77
      %p79 = scmp.ne.s32.totalorder %s68, %s71
      %p80 = scmp.eq.s32.totalorder %s21, 1
      %p81 = por %p79, %p80
      %p82 = scmp.ne.s32.totalorder %s71, %s72
      %p83 = scmp.eq.s32.totalorder %s21, 0
      %p84 = por %p82, %p83
      %p85 = scmp.ne.s32.totalorder %s71, %s72
      %p86 = scmp.eq.s32.totalorder %s22, 1
      %p87 = por %p85, %p86
      %p89 = scmp.ne.s32.totalorder %s72, %s88
      %p90 = scmp.eq.s32.totalorder %s22, 0
      %p91 = por %p89, %p90
      %s92 = ssub.s32 %s23, %s35
      %p93 = scmp.eq.s32.totalorder %s92, 0
      %s95 = sadd.s32 %s94, 1
      %s96 = scalar_select %p93, %s94, %s95
      %p99 = pneg %p93
      %p100 = scmp.eq.s32.totalorder %s16, 1
      %p101 = por %p99, %p100
      %p102 = scmp.ne.s32.totalorder %s94, %s97
      %p103 = scmp.eq.s32.totalorder %s16, 0
      %p104 = por %p102, %p103
      %p105 = scmp.ne.s32.totalorder %s94, %s97
      %p106 = scmp.eq.s32.totalorder %s21, 1
      %p107 = por %p105, %p106
      %p108 = scmp.ne.s32.totalorder %s97, %s98
      %p109 = scmp.eq.s32.totalorder %s21, 0
      %p110 = por %p108, %p109
      %p111 = scmp.ne.s32.totalorder %s97, %s98
      %p112 = scmp.eq.s32.totalorder %s22, 1
      %p113 = por %p111, %p112
      %p115 = scmp.ne.s32.totalorder %s98, %s114
      %p116 = scmp.eq.s32.totalorder %s22, 0
      %p117 = por %p115, %p116
      %s118 = ssub.s32 %s23, %s35
      %p119 = scmp.eq.s32.totalorder %s118, 0
      %s121 = sadd.s32 %s120, 1
      %s122 = scalar_select %p119, %s120, %s121
      %p125 = pneg %p119
      %p126 = scmp.eq.s32.totalorder %s16, 1
      %p127 = por %p125, %p126
      %p128 = scmp.ne.s32.totalorder %s120, %s123
      %p129 = scmp.eq.s32.totalorder %s16, 0
      %p130 = por %p128, %p129
      %p131 = scmp.ne.s32.totalorder %s120, %s123
      %p132 = scmp.eq.s32.totalorder %s21, 1
      %p133 = por %p131, %p132
      %p134 = scmp.ne.s32.totalorder %s123, %s124
      %p135 = scmp.eq.s32.totalorder %s21, 0
      %p136 = por %p134, %p135
      %p137 = scmp.ne.s32.totalorder %s123, %s124
      %p138 = scmp.eq.s32.totalorder %s22, 1
      %p139 = por %p137, %p138
      %p141 = scmp.ne.s32.totalorder %s124, %s140
      %p142 = scmp.eq.s32.totalorder %s22, 0
      %p143 = por %p141, %p142
      %p144 = scmp.le.s32.totalorder 1, %s16
      %p145 = scmp.lt.s32.totalorder %s16, 3
      %p146 = pnand %p144, %p145
      %p147 = pneg %p146
      // Predicated region
      $region9: #{tpu_custom_call.1} parent=5 // pred_check
        _
      $region10: #{tpu_custom_call.1} parent=5 // pred_check_branch
        %149 = sbr.rel (%p146) target = $region12
      $region11: #{tpu_custom_call.1} parent=5 // pred_region
        %s150 = ssub.s32 %s16, 1
      $region12: #{tpu_custom_call.1} parent=5 // pred_fallthru
        _
      %p151 = scmp.lt.s32.totalorder %s16, 2
      // Predicated region
      $region13: #{tpu_custom_call.1} parent=5 // pred_check
        %p152 = pneg %p151
      $region14: #{tpu_custom_call.1} parent=5 // pred_check_branch
        %154 = sbr.rel (%p152) target = $region16
      $region15: #{tpu_custom_call.1} parent=5 // pred_region
        // Predicated region
        $region17: #{tpu_custom_call.1} parent=15 // pred_check
          %p155 = pneg %p50
        $region18: #{tpu_custom_call.1} parent=15 // pred_check_branch
          %157 = sbr.rel (%p155) target = $region20
        $region19: #{tpu_custom_call.1} parent=15 // pred_region
          %s158 = sand.u32 %s40, 1
          %s159 = scalar_lea.sflag [#allocation5], %s158
          %s160 = sand.u32 %s40, 1
          %s161 = smul.addr %s160, 8
          %s162 = scalar_lea.vmem [#allocation4], %s161
          %s164 = ssub.s32 128, 128
          %165 = vsyncadd %s159, %s164
          %s166 = smul.addr %s23, 4
          %s167 = sadd.s32 %s24, %s166
          %s168 = smul.addr %s167, 32
          %s169 = scalar_lea.hbm %s0, %s168
          %s170 = sshll.u32 %s162, 4
          %s171 = int_to_ptr.vmem [resolvable:$true] %s170
          %176 = dma.hbm_to_vmem [thread:$0]  %s169, 128, %s171, %s159, 32, 32, 2
        $region20: #{tpu_custom_call.1} parent=15 // pred_fallthru
          _
        // Predicated region
        $region21: #{tpu_custom_call.1} parent=15 // pred_check
          %p177 = pneg %p78
        $region22: #{tpu_custom_call.1} parent=15 // pred_check_branch
          %179 = sbr.rel (%p177) target = $region24
        $region23: #{tpu_custom_call.1} parent=15 // pred_region
          %s180 = sand.u32 %s68, 1
          %s181 = scalar_lea.sflag [#allocation7], %s180
          %s182 = sand.u32 %s68, 1
          %s183 = smul.addr %s182, 2
          %s184 = scalar_lea.vmem [#allocation6], %s183
          %s186 = ssub.s32 32, 32
          %187 = vsyncadd %s181, %s186
          %s188 = sadd.s32 %s24, %s23
          %s189 = smul.addr %s188, 32
          %s190 = scalar_lea.hbm %s1, %s189
          %s192 = sshll.u32 %s184, 4
          %s193 = int_to_ptr.vmem [resolvable:$true] %s192
          %195 = dma.hbm_to_vmem [thread:$0]  %s190, 32, %s193, %s181
        $region24: #{tpu_custom_call.1} parent=15 // pred_fallthru
          _
      $region16: #{tpu_custom_call.1} parent=5 // pred_fallthru
        _
      %p196 = scmp.le.s32.totalorder 1, %s16
      %p197 = scmp.lt.s32.totalorder %s16, 3
      %p198 = pnand %p196, %p197
      %p199 = pneg %p198
      // Predicated region
      $region25: #{tpu_custom_call.1} parent=5 // pred_check
        _
      $region26: #{tpu_custom_call.1} parent=5 // pred_check_branch
        %201 = sbr.rel (%p198) target = $region28
      $region27: #{tpu_custom_call.1} parent=5 // pred_region
        %s202 = ssub.s32 %s16, 1
        %s203 = sand.u32 %s43, 1
        %s204 = scalar_lea.sflag [#allocation5], %s203
        %s205 = sand.u32 %s43, 1
        %s206 = smul.addr %s205, 8
        %s207 = scalar_lea.vmem [#allocation4], %s206
        // Predicated region
        $region29: #{tpu_custom_call.1} parent=27 // pred_check
          %p208 = pneg %p56
        $region30: #{tpu_custom_call.1} parent=27 // pred_check_branch
          %210 = sbr.rel (%p208) target = $region32
        $region31: #{tpu_custom_call.1} parent=27 // pred_region
          %211 = dma.done %s204, 128
        $region32: #{tpu_custom_call.1} parent=27 // pred_fallthru
          _
        %s212 = sand.u32 %s71, 1
        %s213 = scalar_lea.sflag [#allocation7], %s212
        %s214 = sand.u32 %s71, 1
        %s215 = smul.addr %s214, 2
        %s216 = scalar_lea.vmem [#allocation6], %s215
        // Predicated region
        $region33: #{tpu_custom_call.1} parent=27 // pred_check
          %p217 = pneg %p84
        $region34: #{tpu_custom_call.1} parent=27 // pred_check_branch
          %219 = sbr.rel (%p217) target = $region36
        $region35: #{tpu_custom_call.1} parent=27 // pred_region
          %220 = dma.done %s213, 32
        $region36: #{tpu_custom_call.1} parent=27 // pred_fallthru
          _
        %s221 = sand.u32 %s43, 1
        %s222 = scalar_lea.sflag [#allocation5], %s221
        %s223 = sand.u32 %s43, 1
        %s224 = smul.addr %s223, 8
        %s225 = scalar_lea.vmem [#allocation4], %s224
        %p226 = pneg %p56
        %p227 = pneg %p53
        %s228 = sand.u32 %s71, 1
        %s229 = scalar_lea.sflag [#allocation7], %s228
        %s230 = sand.u32 %s71, 1
        %s231 = smul.addr %s230, 2
        %s232 = scalar_lea.vmem [#allocation6], %s231
        %p233 = pneg %p84
        %p234 = pneg %p81
        %p235 = pneg %p110
        %p236 = pneg %p107
        %p237 = scmp.lt.s32.totalorder %s25, 1
        %s238 = scalar_select %p237, %s25, 1
        %s239 = scalar_lea.vmem %s2, %s238
        %p240 = pneg %p136
        %p241 = pneg %p133
        %p242 = scmp.lt.s32.totalorder %s25, 1
        %s243 = scalar_select %p242, %s25, 1
        %s244 = scalar_lea.vmem %s3, %s243
        %p245 = scmp.lt.s32.totalorder %s25, 1
        %s246 = scalar_select %p245, %s25, 1
        %s247 = scalar_lea.vmem %s2, %s246
        %p248 = scmp.lt.s32.totalorder %s25, 1
        %s249 = scalar_select %p248, %s25, 1
        %s250 = scalar_lea.vmem %s3, %s249
        %p251 = scmp.eq.s32.totalorder %s26, 0
        // Predicated region
        $region37: #{tpu_custom_call.1} parent=27 // pred_check
          %p252 = pneg %p251
        $region38: #{tpu_custom_call.1} parent=27 // pred_check_branch
          %254 = sbr.rel (%p252) target = $region40
        $region39: #{tpu_custom_call.1} parent=27 // pred_region
          %255 = vst [vmem:[#allocation2] sm:$0x1] 0.0
          %256 = vst [vmem:[#allocation3] sm:$0x1] 0.0
        $region40: #{tpu_custom_call.1} parent=27 // pred_fallthru
          _
        %v257 = vld [vmem:[%s216] sm:$0x3]
        %v258 = vld [vmem:[%s207] sm:$0x3]
        %s259 = scalar_lea.vmem %s207, 2 [#allocation4]
        %v260 = vld [vmem:[%s259] sm:$0x3]
        %v261 = vmax.f32 %v258, %v260
        %s262 = scalar_lea.vmem %s207, 4 [#allocation4]
        %v263 = vld [vmem:[%s262] sm:$0x3]
        %v264 = vmax.f32 %v261, %v263
        %s265 = scalar_lea.vmem %s207, 6 [#allocation4]
        %v266 = vld [vmem:[%s265] sm:$0x3]
        %v267 = vmax.f32 %v264, %v266
        %v268 = vsub.f32 %v258, %v267
        %v269 = vmul.f32 %v268, 1.442695
        %v270 = vpow.pop %v269
        %vm271 = vcmp.eq.s32.totalorder %v257, 0
        %v272 = vsel %vm271, %v258, 0.0
        %v273 = vsub.f32 %v260, %v267
        %v274 = vmul.f32 %v273, 1.442695
        %v275 = vpow.pop %v274
        %v276 = vadd.f32 %v270, %v275
        %vm277 = vcmp.eq.s32.totalorder %v257, 1
        %v278 = vsel %vm277, %v260, %v272
        %v279 = vsub.f32 %v263, %v267
        %v280 = vmul.f32 %v279, 1.442695
        %v281 = vpow.pop %v280
        %v282 = vadd.f32 %v276, %v281
        %vm283 = vcmp.eq.s32.totalorder %v257, 2
        %v284 = vsel %vm283, %v263, %v278
        %v285 = vsub.f32 %v266, %v267
        %v286 = vmul.f32 %v285, 1.442695
        %v287 = vpow.pop %v286
        %v288 = vadd.f32 %v282, %v287
        %vm289 = vcmp.eq.s32.totalorder %v257, 3
        %v290 = vsel %vm289, %v266, %v284
        %v291 = vlog2.pop %v288
        %v292 = vmul.f32 %v291, 0.6931472
        %v293 = vadd.f32 %v292, %v267
        %v294 = vsub.f32 %v293, %v290
        %vm295 = vcmp.ne.s32.totalorder %v257, 255
        %v296 = vsel %vm295, %v294, 0.0
        %v297 = vld [vmem:[#allocation2] sm:$0x1]
        %vm298 = vcmask 1041408
        %v299 = vsel %vm298, %v296, 0.0
        %v300 = vrot.slane %v299, 4
        %v301 = vadd.f32 %v299, %v300
        %v302 = vrot.slane %v301, 2
        %v303 = vadd.f32 %v301, %v302
        %v304 = vrot.slane %v303, 1
        %v305 = vadd.f32 %v303, %v304
        %v306 = vadd.f32 %v297, %v305
        %307 = vst [vmem:[#allocation2] sm:$0x1] %v306
        %v308 = vld [vmem:[#allocation3] sm:$0x1]
        %vm309 = vcmp.ne.f32.partialorder %v296, 0.0
        %v310 = vsel %vm309, 1, 0
        %v311 = vcvt.s32.f32 %v310
        %v312 = vsel %vm298, %v311, 0.0
        %v313 = vrot.slane %v312, 4
        %v314 = vadd.f32 %v312, %v313
        %v315 = vrot.slane %v314, 2
        %v316 = vadd.f32 %v314, %v315
        %v317 = vrot.slane %v316, 1
        %v318 = vadd.f32 %v316, %v317
        %v319 = vadd.f32 %v308, %v318
        %320 = vst [vmem:[#allocation3] sm:$0x1] %v319
        // Predicated region
        $region41: #{tpu_custom_call.1} parent=27 // pred_check
          %p321 = pneg %p251
        $region42: #{tpu_custom_call.1} parent=27 // pred_check_branch
          %323 = sbr.rel (%p321) target = $region44
        $region43: #{tpu_custom_call.1} parent=27 // pred_region
          %v324 = vld [vmem:[#allocation2] sm:$0x1]
          %vm325 = vcmask 1040384
          %v326 = vsel %vm325, %v324, 0.0
          %327 = vadd.xlane.f32.xlu0 %v326
          %v328 = vpop.xlane.xlu0 %327
          %v329 = vrot.slane %v328, 4
          %v330 = vadd.f32 %v328, %v329
          %v331 = vrot.slane %v330, 2
          %v332 = vadd.f32 %v330, %v331
          %v333 = vrot.slane %v332, 1
          %v334 = vadd.f32 %v332, %v333
          %s335 = vtos %v334
          %v336 = vstv %s335
          %vm337 = vcmask 0
          %338 = vst.msk [vmem:[%s247] sm:$0x1] %vm337, %v336
          %v339 = vld [vmem:[#allocation3] sm:$0x1]
          %v340 = vsel %vm325, %v339, 0.0
          %341 = vadd.xlane.f32.xlu0 %v340
          %v342 = vpop.xlane.xlu0 %341
          %v343 = vrot.slane %v342, 4
          %v344 = vadd.f32 %v342, %v343
          %v345 = vrot.slane %v344, 2
          %v346 = vadd.f32 %v344, %v345
          %v347 = vrot.slane %v346, 1
          %v348 = vadd.f32 %v346, %v347
          %s349 = vtos %v348
          %v350 = vstv %s349
          %351 = vst.msk [vmem:[%s250] sm:$0x1] %vm337, %v350
        $region44: #{tpu_custom_call.1} parent=27 // pred_fallthru
          _
        %p352 = scmp.lt.s32.totalorder %s25, 1
        %s353 = scalar_select %p352, %s25, 1
        %s354 = scalar_lea.vmem %s2, %s353
        %p355 = scmp.lt.s32.totalorder %s25, 1
        %s356 = scalar_select %p355, %s25, 1
        %s357 = scalar_lea.vmem %s3, %s356
        // Predicated region
        $region45: #{tpu_custom_call.1} parent=27 // pred_check
          %p358 = pneg %p107
        $region46: #{tpu_custom_call.1} parent=27 // pred_check_branch
          %360 = sbr.rel (%p358) target = $region48
        $region47: #{tpu_custom_call.1} parent=27 // pred_region
          _
        $region48: #{tpu_custom_call.1} parent=27 // pred_fallthru
          _
        // Predicated region
        $region49: #{tpu_custom_call.1} parent=27 // pred_check
          %p361 = pneg %p133
        $region50: #{tpu_custom_call.1} parent=27 // pred_check_branch
          %363 = sbr.rel (%p361) target = $region52
        $region51: #{tpu_custom_call.1} parent=27 // pred_region
          _
        $region52: #{tpu_custom_call.1} parent=27 // pred_fallthru
          _
      $region28: #{tpu_custom_call.1} parent=5 // pred_fallthru
        _
      %p364 = scmp.le.s32.totalorder 2, %s16
      // Predicated region
      $region53: #{tpu_custom_call.1} parent=5 // pred_check
        %p365 = pneg %p364
      $region54: #{tpu_custom_call.1} parent=5 // pred_check_branch
        %367 = sbr.rel (%p365) target = $region56
      $region55: #{tpu_custom_call.1} parent=5 // pred_region
        %s368 = ssub.s32 %s16, 2
        // Predicated region
        $region57: #{tpu_custom_call.1} parent=55 // pred_check
          %p369 = pneg %p113
        $region58: #{tpu_custom_call.1} parent=55 // pred_check_branch
          %371 = sbr.rel (%p369) target = $region60
        $region59: #{tpu_custom_call.1} parent=55 // pred_region
          %p372 = scmp.lt.s32.totalorder %s27, 1
          %s373 = scalar_select %p372, %s27, 1
          %s374 = scalar_lea.vmem %s2, %s373
        $region60: #{tpu_custom_call.1} parent=55 // pred_fallthru
          _
        // Predicated region
        $region61: #{tpu_custom_call.1} parent=55 // pred_check
          %p375 = pneg %p139
        $region62: #{tpu_custom_call.1} parent=55 // pred_check_branch
          %377 = sbr.rel (%p375) target = $region64
        $region63: #{tpu_custom_call.1} parent=55 // pred_region
          %p378 = scmp.lt.s32.totalorder %s27, 1
          %s379 = scalar_select %p378, %s27, 1
          %s380 = scalar_lea.vmem %s3, %s379
        $region64: #{tpu_custom_call.1} parent=55 // pred_fallthru
          _
      $region56: #{tpu_custom_call.1} parent=5 // pred_fallthru
        _
    $region6: #{tpu_custom_call.1} parent=1 // loop_footer
      %s20 = sadd.s32 1, %s16
    $region7: #{tpu_custom_call.1} parent=1 // loop_footer_branch
      %15 = sbr.rel target = $region3
    $region8: #{tpu_custom_call.1} parent=1 // loop_exit
      _
    %381 = vsyncpa [#allocation5], 1
    %s382 = scalar_lea.sflag [#allocation5], 1
    %383 = vsyncpa %s382, 1
    %384 = vsyncpa [#allocation7], 1
    %s385 = scalar_lea.sflag [#allocation7], 1
    %386 = vsyncpa %s385, 1

</llo_original>
